<compile_context>
chip_gen: v7x
topology: tpu7x:2x2x1
jax: 0.10.0
libtpu: 0.0.40
codegen_flags: <defaults>
</compile_context>

<pallas_src>
import jax
import jax.numpy as jnp
from jax.experimental import pallas as pl
from jax.experimental.pallas import tpu as pltpu


def _up_kernel(x_ref, w_ref, b_ref, o_ref):
    # x_ref: (1, Cin, thw)      streamed activation tile (compute dtype, bf16)
    # w_ref: (4*Cout, Cin)      packed weights, VMEM-resident (constant index_map)
    # b_ref: (4*Cout, 1)        f32 bias column, VMEM-resident
    # o_ref: (1, 4*Cout, thw)   lane-dense output tile (thw is a 128-multiple)
    acc = jnp.dot(w_ref[...], x_ref[0], preferred_element_type=jnp.float32)
    o_ref[0] = (acc + b_ref[...]).astype(o_ref.dtype)


def _pick_spatial_tile(hw, cin, kr, in_bytes, out_bytes, budget_bytes=12 << 20):
    """Largest tile along flattened H*W that (a) divides hw (no pad/slice),
    (b) is a multiple of 128 lanes when possible, (c) keeps the double-buffered
    streaming x/y tiles under a VMEM budget."""
    per_col = 2 * (cin * in_bytes + kr * out_bytes)   # 2x for double buffering
    cap = max(128, budget_bytes // max(per_col, 1))
    best = None
    t = 128
    while t <= min(hw, cap):
        if hw % t == 0:
            best = t
        t += 128
    # Fallback: full spatial extent (block dim == array dim is always legal).
    return best if best is not None else hw


def up_forward(x_nchw, weight, bias, *, compute_dtype=jnp.bfloat16):
    """ConvTranspose2d(k=2, s=2) forward, PyTorch-compatible NCHW in / NCHW out.

    x_nchw: (N, Cin, H, W)   weight: (Cin, Cout, 2, 2)   bias: (Cout,)
    returns (N, Cout, 2H, 2W)
    """
    N, Cin, H, W = x_nchw.shape
    Cout = weight.shape[1]
    HW = H * W
    Kr = 4 * Cout
    out_dtype = x_nchw.dtype

    # Free reshape of contiguous trailing dims (no HBM layout pass).
    x3 = x_nchw.reshape(N, Cin, HW).astype(compute_dtype)

    # weight (Cin, Cout, kh, kw) -> (kh, kw, Cout, Cin) -> (4*Cout, Cin).  Tiny.
    w_mat = jnp.transpose(weight, (2, 3, 1, 0)).reshape(Kr, Cin).astype(compute_dtype)
    # bias row r = (kh,kw,oc) -> bias[oc]; keep f32 for the accumulator add.
    b_col = jnp.tile(bias.astype(jnp.float32), 4).reshape(Kr, 1)

    thw = _pick_spatial_tile(
        HW, Cin, Kr,
        in_bytes=jnp.dtype(compute_dtype).itemsize,
        out_bytes=jnp.dtype(out_dtype).itemsize,
    )

    y = pl.pallas_call(
        _up_kernel,
        out_shape=jax.ShapeDtypeStruct((N, Kr, HW), out_dtype),
        grid_spec=pltpu.PrefetchScalarGridSpec(
            num_scalar_prefetch=0,
            grid=(N, HW // thw),
            in_specs=[
                pl.BlockSpec((1, Cin, thw), lambda n, j: (n, 0, j)),   # streamed
                pl.BlockSpec((Kr, Cin), lambda n, j: (0, 0)),          # resident
                pl.BlockSpec((Kr, 1), lambda n, j: (0, 0)),            # resident
            ],
            out_specs=pl.BlockSpec((1, Kr, thw), lambda n, j: (n, 0, j)),
        ),
        compiler_params=pltpu.CompilerParams(
            dimension_semantics=("parallel", "parallel"),  # no reduction axis
            vmem_limit_bytes=48 * 1024 * 1024,             # > defaults, < v7x 64MiB
        ),
    )(x3, w_mat, b_col)

    # Single XLA layout pass: interleave the 2x2 sub-pixel results into NCHW.
    # (A stride-2 scatter directly from the kernel is not expressible via
    #  BlockSpec; the surrounding reshapes are free.)
    y = y.reshape(N, 2, 2, Cout, H, W)                 # (n, kh, kw, oc, h, w)
    y = jnp.transpose(y, (0, 3, 4, 1, 5, 2))           # (n, oc, h, kh, w, kw)
    return y.reshape(N, Cout, 2 * H, 2 * W)


def _reference(x_nchw, weight, bias):
    """Pure-JAX (f32, HIGHEST precision) reference of ConvTranspose2d(k=2, s=2)."""
    N, Cin, H, W = x_nchw.shape
    Cout = weight.shape[1]
    y = jnp.einsum("nihw,iokl->nohkwl", x_nchw, weight,
                   precision=jax.lax.Precision.HIGHEST)
    y = y.reshape(N, Cout, 2 * H, 2 * W)
    return y + bias[None, :, None, None]


if __name__ == "__main__":
    key = jax.random.PRNGKey(0)
    k_x, k_w, k_b = jax.random.split(key, 3)

    N, Cin, Cout, H, W = 2, 4, 8, 16, 16

    x = jax.random.normal(k_x, (N, Cin, H, W), dtype=jnp.float32)
    # Deterministic PyTorch-like init (uniform in +-1/sqrt(fan_in)); synthetic params.
    bound = 1.0 / (Cin * 2 * 2) ** 0.5
    weight = jax.random.uniform(k_w, (Cin, Cout, 2, 2), jnp.float32, -bound, bound)
    bias = jax.random.uniform(k_b, (Cout,), jnp.float32, -bound, bound)

    out = up_forward(x, weight, bias)
    out = jax.block_until_ready(out)
    assert out.shape == (N, Cout, 2 * H, 2 * W), out.shape

    # Loose check vs. exact f32 semantics (kernel uses bf16 operands).
    ref = _reference(x, weight, bias)
    assert jnp.allclose(out, ref, atol=5e-2, rtol=5e-2), "mismatch vs f32 reference"

    # Tight check vs. a reference with the same bf16 input rounding (f32 accumulate).
    xq = x.astype(jnp.bfloat16).astype(jnp.float32)
    wq = weight.astype(jnp.bfloat16).astype(jnp.float32)
    ref_bf = _reference(xq, wq, bias)
    assert jnp.allclose(out, ref_bf, atol=2e-3, rtol=2e-3), "mismatch vs bf16-rounded reference"

    print("KERNEL_OK")
</pallas_src>

<mosaic_0001>
module attributes {stable_mosaic.version = 11 : i64} {
  func.func @_up_kernel(%arg0: i32, %arg1: i32, %arg2: memref<1x4x256xbf16, #tpu.memory_space<vmem>>, %arg3: memref<32x4xbf16, #tpu.memory_space<vmem>>, %arg4: memref<32x1xf32, #tpu.memory_space<vmem>>, %arg5: memref<1x32x256xf32, #tpu.memory_space<vmem>>) attributes {dimension_semantics = [#tpu.dimension_semantics<parallel>, #tpu.dimension_semantics<parallel>], iteration_bounds = array<i64: 2, 1>, scalar_prefetch = 0 : i64, scratch_operands = 0 : i64, tpu.core_type = #tpu.core_type<tc>, window_params = [{transform_indices = @transform_0, window_bounds = array<i64: 1, 4, 256>}, {pipeline_mode = #tpu.pipeline_mode<synchronous>, transform_indices = @transform_1, window_bounds = array<i64: 32, 4>}, {pipeline_mode = #tpu.pipeline_mode<synchronous>, transform_indices = @transform_2, window_bounds = array<i64: 32, 1>}, {transform_indices = @transform_3, window_bounds = array<i64: 1, 32, 256>}]} {
    %c0 = arith.constant 0 : index
    %c0_0 = arith.constant 0 : index
    %0 = vector.load %arg3[%c0, %c0_0] : memref<32x4xbf16, #tpu.memory_space<vmem>>, vector<32x4xbf16>
    %c0_1 = arith.constant 0 : index
    %c0_2 = arith.constant 0 : index
    %c0_3 = arith.constant 0 : index
    %1 = vector.load %arg2[%c0_1, %c0_2, %c0_3] : memref<1x4x256xbf16, #tpu.memory_space<vmem>>, vector<1x4x256xbf16>
    %2 = vector.shape_cast %1 : vector<1x4x256xbf16> to vector<4x256xbf16>
    %cst = arith.constant dense<0.000000e+00> : vector<32x256xf32>
    %3 = tpu.matmul %0, %2, %cst {dimension_numbers = #tpu.dot_dimension_numbers<[1], [0], [0], [1], [0, 0, 1, 1], [], []>} : vector<32x4xbf16>, vector<4x256xbf16>, vector<32x256xf32> -> vector<32x256xf32>
    %c0_4 = arith.constant 0 : index
    %c0_5 = arith.constant 0 : index
    %4 = vector.load %arg4[%c0_4, %c0_5] : memref<32x1xf32, #tpu.memory_space<vmem>>, vector<32x1xf32>
    %5 = vector.broadcast %4 : vector<32x1xf32> to vector<32x256xf32>
    %6 = arith.addf %3, %5 : vector<32x256xf32>
    %c0_6 = arith.constant 0 : index
    %c0_7 = arith.constant 0 : index
    %c0_8 = arith.constant 0 : index
    %7 = vector.load %arg5[%c0_6, %c0_7, %c0_8] : memref<1x32x256xf32, #tpu.memory_space<vmem>>, vector<1x32x256xf32>
    %8 = vector.shape_cast %7 : vector<1x32x256xf32> to vector<32x256xf32>
    %9 = vector.shape_cast %6 : vector<32x256xf32> to vector<1x32x256xf32>
    tpu.vector_store %arg5[%c0_6, %c0_7, %c0_8], %9 {strides = array<i32>} : memref<1x32x256xf32, #tpu.memory_space<vmem>>, vector<1x32x256xf32>,
    return
  }
  func.func @transform_0(%arg0: i32, %arg1: i32) -> (i32, i32, i32) {
    %c0_i32 = arith.constant 0 : i32
    %c0_i32_0 = arith.constant 0 : i32
    return %arg0, %c0_i32, %arg1 : i32, i32, i32
  }
  func.func @transform_1(%arg0: i32, %arg1: i32) -> (i32, i32) {
    %c0_i32 = arith.constant 0 : i32
    %c0_i32_0 = arith.constant 0 : i32
    %c0_i32_1 = arith.constant 0 : i32
    return %c0_i32, %c0_i32_0 : i32, i32
  }
  func.func @transform_2(%arg0: i32, %arg1: i32) -> (i32, i32) {
    %c0_i32 = arith.constant 0 : i32
    %c0_i32_0 = arith.constant 0 : i32
    %c0_i32_1 = arith.constant 0 : i32
    return %c0_i32, %c0_i32_0 : i32, i32
  }
  func.func @transform_3(%arg0: i32, %arg1: i32) -> (i32, i32, i32) {
    %c0_i32 = arith.constant 0 : i32
    %c0_i32_0 = arith.constant 0 : i32
    return %arg0, %c0_i32, %arg1 : i32, i32, i32
  }
}

</mosaic_0001>

<llo_original>
// kernel: tpu_custom_call.1
$region0: #{tpu_custom_call.1}
  #allocation0 [shape = 'u32[]', space=smem, size = 0x4, offset = 0x4, fixed_abs, tag = 'smem constant byte address 0x4 - core index']
  #allocation1 [shape = 'u32[144,128]{1,0:T(1,128)}', space=vmem, size = 0x12000, scoped, tag = 'internal scratch']
  %s0 = inlined_call_operand.vmem [shape: bf16[2,4,256], index: 0, kind: input, shape index: {}]
  %s1 = inlined_call_operand.vmem [shape: bf16[32,4], index: 1, kind: input, shape index: {}]
  %s2 = inlined_call_operand.vmem [shape: f32[32,1], index: 2, kind: input, shape index: {}]
  %s3 = inlined_call_operand.hbm [shape: f32[2,32,256], index: 3, kind: output, shape index: {}]
  %s4 = sld [smem:[#allocation0]]
  $region45: #{tpu_custom_call.1} parent=0
    _
  %s6 = ssub.s32 1, %s4
  %s7 = scalar_select 0, %s6, %s4
  $region1: #{tpu_custom_call.1} parent=0
    #allocation2 [shape = 'u8[65536]{0}', space=vmem, size = 0x10000, scoped, tag = 'output window, operand 0']
    #allocation3 [shape = 's32[2]{0}', space=sflag, size = 0x8, scoped, tag = 'scoped memory for tpu_custom_call.1']
    %8 = vsyncpa [#allocation3], 0
    %s9 = scalar_lea.sflag [#allocation3], 1
    %10 = vsyncpa %s9, 0
    loop: start=0, step=1, limit=4
    $region2: #{tpu_custom_call.1} parent=1 // loop_pre_header
      _
    $region3: #{tpu_custom_call.1} parent=1 // loop_header
      %s12 = sphi 0, %s16
      %p13 = scmp.ge.s32.totalorder %s12, 4
      %s19 = sphi 0, %s31
      %s20 = sphi 0, %s27
      %s21 = sphi 0, %s19
      %s22 = sphi 0, %s20
      %s23 = sphi 0, %s21
      %s24 = sphi 0, %s22
      %s36 = sphi 0, %s38
      %s39 = sphi 0, %s36
      %s40 = sphi 0, %s39
      %s56 = sphi 0, %s40
      %s60 = sphi 0, %s60
      %s62 = sphi 0, %s60
      %s63 = sphi 0, %s62
      %s77 = sphi 0, %s63
      %s81 = sphi 0, %s81
      %s83 = sphi 0, %s81
      %s84 = sphi 0, %s83
      %s98 = sphi 0, %s84
      %s106 = sphi 0, %s108
      %s109 = sphi 0, %s106
      %s110 = sphi 0, %s109
      %s126 = sphi 0, %s110
    $region4: #{tpu_custom_call.1} parent=1 // loop_header_branch
      %15 = sbr.rel (%p13) target = $region8
    $region5: #{tpu_custom_call.1} parent=1 // loop_body
      %s17 = ssub.s32 %s12, 1
      %s18 = ssub.s32 %s12, 2
      %s25 = sadd.s32 1, %s20
      %p26 = scmp.ge.s32.totalorder %s25, 1
      %s27 = scalar_select %p26, 0, %s25
      %s28 = sadd.s32 1, %s19
      %s29 = scalar_select %p26, %s28, %s19
      %p30 = scmp.ge.s32.totalorder %s29, 2
      %s31 = scalar_select %p30, 0, %s29
      %s32 = ssub.s32 %s19, %s31
      %s33 = ssub.s32 %s20, %s27
      %s34 = sor.u32 %s32, %s33
      %p35 = scmp.eq.s32.totalorder %s34, 0
      %s37 = sadd.s32 %s36, 1
      %s38 = scalar_select %p35, %s36, %s37
      %p41 = pneg %p35
      %p42 = scmp.eq.s32.totalorder %s12, 1
      %p43 = por %p41, %p42
      %p44 = scmp.ne.s32.totalorder %s36, %s39
      %p45 = scmp.eq.s32.totalorder %s12, 0
      %p46 = por %p44, %p45
      %p47 = scmp.ne.s32.totalorder %s36, %s39
      %p48 = scmp.eq.s32.totalorder %s17, 1
      %p49 = por %p47, %p48
      %p50 = scmp.ne.s32.totalorder %s39, %s40
      %p51 = scmp.eq.s32.totalorder %s17, 0
      %p52 = por %p50, %p51
      %p53 = scmp.ne.s32.totalorder %s39, %s40
      %p54 = scmp.eq.s32.totalorder %s18, 1
      %p55 = por %p53, %p54
      %p57 = scmp.ne.s32.totalorder %s40, %s56
      %p58 = scmp.eq.s32.totalorder %s18, 0
      %p59 = por %p57, %p58
      %s61 = sadd.s32 %s60, 1
      %p64 = scmp.eq.s32.totalorder %s12, 1
      %p65 = scmp.ne.s32.totalorder %s60, %s62
      %p66 = scmp.eq.s32.totalorder %s12, 0
      %p67 = por %p65, %p66
      %p68 = scmp.ne.s32.totalorder %s60, %s62
      %p69 = scmp.eq.s32.totalorder %s17, 1
      %p70 = por %p68, %p69
      %p71 = scmp.ne.s32.totalorder %s62, %s63
      %p72 = scmp.eq.s32.totalorder %s17, 0
      %p73 = por %p71, %p72
      %p74 = scmp.ne.s32.totalorder %s62, %s63
      %p75 = scmp.eq.s32.totalorder %s18, 1
      %p76 = por %p74, %p75
      %p78 = scmp.ne.s32.totalorder %s63, %s77
      %p79 = scmp.eq.s32.totalorder %s18, 0
      %p80 = por %p78, %p79
      %s82 = sadd.s32 %s81, 1
      %p85 = scmp.eq.s32.totalorder %s12, 1
      %p86 = scmp.ne.s32.totalorder %s81, %s83
      %p87 = scmp.eq.s32.totalorder %s12, 0
      %p88 = por %p86, %p87
      %p89 = scmp.ne.s32.totalorder %s81, %s83
      %p90 = scmp.eq.s32.totalorder %s17, 1
      %p91 = por %p89, %p90
      %p92 = scmp.ne.s32.totalorder %s83, %s84
      %p93 = scmp.eq.s32.totalorder %s17, 0
      %p94 = por %p92, %p93
      %p95 = scmp.ne.s32.totalorder %s83, %s84
      %p96 = scmp.eq.s32.totalorder %s18, 1
      %p97 = por %p95, %p96
      %p99 = scmp.ne.s32.totalorder %s84, %s98
      %p100 = scmp.eq.s32.totalorder %s18, 0
      %p101 = por %p99, %p100
      %s102 = ssub.s32 %s19, %s31
      %s103 = ssub.s32 %s20, %s27
      %s104 = sor.u32 %s102, %s103
      %p105 = scmp.eq.s32.totalorder %s104, 0
      %s107 = sadd.s32 %s106, 1
      %s108 = scalar_select %p105, %s106, %s107
      %p111 = pneg %p105
      %p112 = scmp.eq.s32.totalorder %s12, 1
      %p113 = por %p111, %p112
      %p114 = scmp.ne.s32.totalorder %s106, %s109
      %p115 = scmp.eq.s32.totalorder %s12, 0
      %p116 = por %p114, %p115
      %p117 = scmp.ne.s32.totalorder %s106, %s109
      %p118 = scmp.eq.s32.totalorder %s17, 1
      %p119 = por %p117, %p118
      %p120 = scmp.ne.s32.totalorder %s109, %s110
      %p121 = scmp.eq.s32.totalorder %s17, 0
      %p122 = por %p120, %p121
      %p123 = scmp.ne.s32.totalorder %s109, %s110
      %p124 = scmp.eq.s32.totalorder %s18, 1
      %p125 = por %p123, %p124
      %p127 = scmp.ne.s32.totalorder %s110, %s126
      %p128 = scmp.eq.s32.totalorder %s18, 0
      %p129 = por %p127, %p128
      %p130 = scmp.le.s32.totalorder 1, %s12
      %p131 = scmp.lt.s32.totalorder %s12, 3
      %p132 = pnand %p130, %p131
      %p133 = pneg %p132
      // Predicated region
      $region9: #{tpu_custom_call.1} parent=5 // pred_check
        _
      $region10: #{tpu_custom_call.1} parent=5 // pred_check_branch
        %135 = sbr.rel (%p132) target = $region12
      $region11: #{tpu_custom_call.1} parent=5 // pred_region
        %s136 = ssub.s32 %s12, 1
        // Predicated region
        $region13: #{tpu_custom_call.1} parent=11 // pred_check
          %p137 = pneg %p73
        $region14: #{tpu_custom_call.1} parent=11 // pred_check_branch
          %139 = sbr.rel (%p137) target = $region16
        $region15: #{tpu_custom_call.1} parent=11 // pred_region
          _
        $region16: #{tpu_custom_call.1} parent=11 // pred_fallthru
          _
        // Predicated region
        $region17: #{tpu_custom_call.1} parent=11 // pred_check
          %p140 = pneg %p94
        $region18: #{tpu_custom_call.1} parent=11 // pred_check_branch
          %142 = sbr.rel (%p140) target = $region20
        $region19: #{tpu_custom_call.1} parent=11 // pred_region
          _
        $region20: #{tpu_custom_call.1} parent=11 // pred_fallthru
          _
      $region12: #{tpu_custom_call.1} parent=5 // pred_fallthru
        _
      %p143 = scmp.lt.s32.totalorder %s12, 2
      // Predicated region
      $region21: #{tpu_custom_call.1} parent=5 // pred_check
        %p144 = pneg %p143
      $region22: #{tpu_custom_call.1} parent=5 // pred_check_branch
        %146 = sbr.rel (%p144) target = $region24
      $region23: #{tpu_custom_call.1} parent=5 // pred_region
        // Predicated region
        $region25: #{tpu_custom_call.1} parent=23 // pred_check
          %p147 = pneg %p46
        $region26: #{tpu_custom_call.1} parent=23 // pred_check_branch
          %149 = sbr.rel (%p147) target = $region28
        $region27: #{tpu_custom_call.1} parent=23 // pred_region
          %s150 = smul.u32 2, %s20
          %p151 = scmp.lt.s32.totalorder %s19, 1
          %s152 = scalar_select %p151, %s19, 1
          %p153 = scmp.lt.s32.totalorder %s150, 1
          %s154 = scalar_select %p153, %s150, 1
          %s155 = smul.addr %s152, 2
          %s156 = sadd.s32 %s154, %s155
          %s157 = smul.addr %s156, 2
          %s158 = scalar_lea.vmem %s0, %s157
          %s159 = smul.u32 2, %s20
        $region28: #{tpu_custom_call.1} parent=23 // pred_fallthru
          _
      $region24: #{tpu_custom_call.1} parent=5 // pred_fallthru
        _
      %p160 = scmp.le.s32.totalorder 1, %s12
      %p161 = scmp.lt.s32.totalorder %s12, 3
      %p162 = pnand %p160, %p161
      %p163 = pneg %p162
      // Predicated region
      $region29: #{tpu_custom_call.1} parent=5 // pred_check
        _
      $region30: #{tpu_custom_call.1} parent=5 // pred_check_branch
        %165 = sbr.rel (%p162) target = $region32
      $region31: #{tpu_custom_call.1} parent=5 // pred_region
        %s166 = ssub.s32 %s12, 1
        %s167 = smul.u32 2, %s22
        %p168 = scmp.lt.s32.totalorder %s21, 1
        %s169 = scalar_select %p168, %s21, 1
        %p170 = scmp.lt.s32.totalorder %s167, 1
        %s171 = scalar_select %p170, %s167, 1
        %s172 = smul.addr %s169, 2
        %s173 = sadd.s32 %s171, %s172
        %s174 = smul.addr %s173, 2
        %s175 = scalar_lea.vmem %s0, %s174
        %p176 = pneg %p52
        %p177 = pneg %p49
        %p178 = pneg %p73
        %p179 = pneg %p70
        %p180 = pneg %p94
        %p181 = pneg %p91
        %p182 = pneg %p122
        %p183 = pneg %p119
        %s184 = sand.u32 %s109, 1
        %s185 = scalar_lea.sflag [#allocation3], %s184
        %s186 = sand.u32 %s109, 1
        %s187 = smul.addr %s186, 64
        %s188 = scalar_lea.vmem [#allocation2], %s187
        %s189 = smul.u32 2, %s22
        %p190 = scmp.lt.s32.totalorder %s21, 1
        %s191 = scalar_select %p190, %s21, 1
        %p192 = scmp.lt.s32.totalorder %s189, 1
        %s193 = scalar_select %p192, %s189, 1
        %s194 = smul.addr %s191, 2
        %s195 = sadd.s32 %s193, %s194
        %s196 = smul.addr %s195, 2
        %s197 = scalar_lea.vmem %s0, %s196
        %s198 = smul.u32 2, %s22
        %s199 = smul.u32 2, %s22
        %v201 = vld [vmem:[%s1] sm:$0xf]
        %v202 = vld [vmem:[%s1 + $0x4] sm:$0xf]
        %v203 = vld [vmem:[%s1 + $0x8] sm:$0xf]
        %v204 = vld [vmem:[%s1 + $0xc] sm:$0xf]
        %v205 = vld [vmem:[%s197] sm:$0xf]
        %v206 = vld [vmem:[%s2] sm:$0xff]
        %v207 = vld [vmem:[%s2 + $0x8] sm:$0xff]
        %v208 = vld [vmem:[%s2 + $0x10] sm:$0xff]
        %v209 = vld [vmem:[%s2 + $0x18] sm:$0xff]
        %211 = vset.pattern.permute.xlu0 0
        %212 = vperm.xlu0 %211, %v206
        %v213 = vpop.permute.xlu0 %212
        %216 = vset.pattern.permute.xlu0 0
        %217 = vperm.xlu0 %216, %v207
        %v218 = vpop.permute.xlu0 %217
        %221 = vset.pattern.permute.xlu0 0
        %222 = vperm.xlu0 %221, %v208
        %v223 = vpop.permute.xlu0 %222
        %226 = vset.pattern.permute.xlu0 0
        %227 = vperm.xlu0 %226, %v209
        %v228 = vpop.permute.xlu0 %227
        %v234 = vunpack.c.l.b16 %v201
        %v235 = vunpack.c.l.b16 %v202
        %v236 = vunpack.c.l.b16 %v203
        %v237 = vunpack.c.l.b16 %v204
        %v238 = vpack.c.b16 %v235, %v234
        %v239 = vpack.c.b16 %v237, %v236
        %v242 = vunpack.c.l.s4 1983009808
        %v243 = vunpack.c.0.s8 %v242
        %v244 = vlaneseq
        %v245 = vshrl.u32 %v244, 7
        %v246 = vsub.s32 %v243, %v245
        %v247 = vrot.slane %v205, %v246
        %v248 = vcombine.high %v247, %v247
        %vm249 = vcmask 31744
        %v251 = vsel %vm249, %v238, 0
        %v254 = vsel %vm249, %v239, 0
        %vm256 = vcmask 1041408
        %v258 = vsel %vm256, %v247, 0
        %v261 = vsel %vm256, %v248, 0
        %263 = vmatprep.subr.bf16.mxu0 %v261
        %264 = vmatpush1.bf16.msra.mxu0 %v258
        %265 = vmatprep.subr.bf16.mxu0 0
        %266 = vmatpush1.bf16.msra.mxu0 0
        %267 = vmatprep.subr.bf16.mxu0 0
        %268 = vmatpush1.bf16.msra.mxu0 0
        %269 = vmatprep.subr.bf16.mxu0 0
        %270 = vmatpush1.bf16.msra.mxu0 0
        %271 = vmatprep.subr.bf16.mxu0 0
        %272 = vmatpush1.bf16.msra.mxu0 0
        %273 = vmatprep.subr.bf16.mxu0 0
        %274 = vmatpush1.bf16.msra.mxu0 0
        %275 = vmatprep.subr.bf16.mxu0 0
        %276 = vmatpush1.bf16.msra.mxu0 0
        %277 = vmatprep.subr.bf16.mxu0 0
        %278 = vmatpush1.bf16.msra.mxu0 0
        %279 = vmatprep.subr.bf16.mxu0 0
        %280 = vmatpush1.bf16.msra.mxu0 0
        %281 = vmatprep.subr.bf16.mxu0 0
        %282 = vmatpush1.bf16.msra.mxu0 0
        %283 = vmatprep.subr.bf16.mxu0 0
        %284 = vmatpush1.bf16.msra.mxu0 0
        %285 = vmatprep.subr.bf16.mxu0 0
        %286 = vmatpush1.bf16.msra.mxu0 0
        %287 = vmatprep.subr.bf16.mxu0 0
        %288 = vmatpush1.bf16.msra.mxu0 0
        %289 = vmatprep.subr.bf16.mxu0 0
        %290 = vmatpush1.bf16.msra.mxu0 0
        %291 = vmatprep.subr.bf16.mxu0 0
        %292 = vmatpush1.bf16.msra.mxu0 0
        %293 = vmatprep.subr.bf16.mxu0 0
        %294 = vmatpush1.bf16.msra.mxu0 0
        %295 = vmatprep.mubr.bf16.mxu0 0
        %296 = vmatmul.mubr.bf16.gmra.mrb[0].mxu0 %v251
        %v297 = vpop.f32.mrb[0].mxu0
        %v298 = vadd.f32 %v213, %v297
        %v299 = vpop.f32.mrb[0].mxu0
        %v300 = vadd.f32 %v213, %v299
        %v301 = vpop.f32.mrb[0].mxu0
        %v302 = vadd.f32 %v218, %v301
        %v303 = vpop.f32.mrb[0].mxu0
        %v304 = vadd.f32 %v218, %v303
        %305 = vmatprep.mubr.bf16.mxu0 0
        %306 = vmatmul.mubr.bf16.gmra.mrb[0].mxu0 %v254
        %v307 = vpop.f32.mrb[0].mxu0
        %v308 = vadd.f32 %v223, %v307
        %v309 = vpop.f32.mrb[0].mxu0
        %v310 = vadd.f32 %v223, %v309
        %v311 = vpop.f32.mrb[0].mxu0
        %v312 = vadd.f32 %v228, %v311
        %v313 = vpop.f32.mrb[0].mxu0
        %v314 = vadd.f32 %v228, %v313
        %315 = vdwg.mxu0
        %316 = vst [vmem:[%s188] sm:$0xff] %v298
        %317 = vst [vmem:[%s188 + $0x8] sm:$0xff] %v300
        %318 = vst [vmem:[%s188 + $0x10] sm:$0xff] %v302
        %319 = vst [vmem:[%s188 + $0x18] sm:$0xff] %v304
        %320 = vst [vmem:[%s188 + $0x20] sm:$0xff] %v308
        %321 = vst [vmem:[%s188 + $0x28] sm:$0xff] %v310
        %322 = vst [vmem:[%s188 + $0x30] sm:$0xff] %v312
        %323 = vst [vmem:[%s188 + $0x38] sm:$0xff] %v314
        %s324 = sand.u32 %s109, 1
        %s325 = scalar_lea.sflag [#allocation3], %s324
        %s326 = sand.u32 %s109, 1
        %s327 = smul.addr %s326, 64
        %s328 = scalar_lea.vmem [#allocation2], %s327
        // Predicated region
        $region33: #{tpu_custom_call.1} parent=31 // pred_check
          %p329 = pneg %p119
        $region34: #{tpu_custom_call.1} parent=31 // pred_check_branch
          %331 = sbr.rel (%p329) target = $region36
        $region35: #{tpu_custom_call.1} parent=31 // pred_region
          %s332 = smul.u32 2, %s22
          %s334 = ssub.s32 1024, 1024
          %335 = vsyncadd %s325, %s334
          %s336 = smul.addr %s21, 8
          %s337 = sadd.s32 %s332, %s336
          %s338 = smul.addr %s337, 128
          %s339 = scalar_lea.hbm %s3, %s338
          %s340 = sshll.u32 %s328, 4
          %s341 = int_to_ptr.vmem [resolvable:$true] %s340
          %346 = dma.vmem_to_hbm [thread:$0]  %s341, 1024, %s339, %s325, 256, 256, 16
        $region36: #{tpu_custom_call.1} parent=31 // pred_fallthru
          _
      $region32: #{tpu_custom_call.1} parent=5 // pred_fallthru
        _
      %p347 = scmp.le.s32.totalorder 2, %s12
      // Predicated region
      $region37: #{tpu_custom_call.1} parent=5 // pred_check
        %p348 = pneg %p347
      $region38: #{tpu_custom_call.1} parent=5 // pred_check_branch
        %350 = sbr.rel (%p348) target = $region40
      $region39: #{tpu_custom_call.1} parent=5 // pred_region
        %s351 = ssub.s32 %s12, 2
        // Predicated region
        $region41: #{tpu_custom_call.1} parent=39 // pred_check
          %p352 = pneg %p125
        $region42: #{tpu_custom_call.1} parent=39 // pred_check_branch
          %354 = sbr.rel (%p352) target = $region44
        $region43: #{tpu_custom_call.1} parent=39 // pred_region
          %s355 = sand.u32 %s110, 1
          %s356 = scalar_lea.sflag [#allocation3], %s355
          %s357 = sand.u32 %s110, 1
          %s358 = smul.addr %s357, 64
          %s359 = scalar_lea.vmem [#allocation2], %s358
          %360 = dma.done %s356, 1024
        $region44: #{tpu_custom_call.1} parent=39 // pred_fallthru
          _
      $region40: #{tpu_custom_call.1} parent=5 // pred_fallthru
        _
    $region6: #{tpu_custom_call.1} parent=1 // loop_footer
      %s16 = sadd.s32 1, %s12
    $region7: #{tpu_custom_call.1} parent=1 // loop_footer_branch
      %11 = sbr.rel target = $region3
    $region8: #{tpu_custom_call.1} parent=1 // loop_exit
      _
    %361 = vsyncpa [#allocation3], 1
    %s362 = scalar_lea.sflag [#allocation3], 1
    %363 = vsyncpa %s362, 1

</llo_original>
